<compile_context>
chip_gen: v7x
topology: tpu7x:2x2x1
jax: 0.10.0
libtpu: 0.0.40
codegen_flags: <defaults>
</compile_context>

<pallas_src>
import functools

import jax
import jax.numpy as jnp
from jax import lax
from jax.experimental import pallas as pl
from jax.experimental.pallas import tpu as pltpu


def _ngram_kernel(qids_ref, kids_ref, xk_ref, xq_ref, w0t_ref, w1t_ref, b_ref,
                  o_ref, *, ngram: int, shift_step: int):
    """One (batch, query-tile) grid step.

    qids_ref: (1, tq, ngram) int32, qids[m, g] = ids[q0 + m - g]   (pre-shifted)
    kids_ref: (1, ngram, seq) int32, kids[g, n] = ids[n - shift_step - g]
    xk_ref:   (1, seq, d)  full key rows of x (for the mask @ x mixing)
    xq_ref:   (1, tq, d)   query rows of x (for the t1(x) term)
    """
    f32 = jnp.float32
    tq = o_ref.shape[1]
    seq = xk_ref.shape[1]
    q0 = pl.program_id(1) * tq                      # global row offset of this tile

    # Global row / key-column indices for this (tq, seq) mask tile.
    row = lax.broadcasted_iota(jnp.int32, (tq, seq), 0) + q0
    col = lax.broadcasted_iota(jnp.int32, (tq, seq), 1)

    # Causal mask AND validity of the shifted indices (keeps everything bool).
    # col >= shift_step + ngram - 1  <=>  all shifted key indices are >= 0; it also
    # kills any wrapped values coming from the circular pre-shift in the wrapper.
    ih = jnp.logical_and(col < row, col >= (shift_step + ngram - 1))

    qids = qids_ref[0]                              # (tq, ngram) int32
    kids = kids_ref[0]                              # (ngram, seq) int32
    for g in range(ngram):                          # static unroll (ngram is tiny)
        qc = qids[:, g:g + 1]                       # (tq, 1):  ids[m - g]
        kr = kids[g:g + 1, :]                       # (1, seq): ids[n - shift - g]
        ih = jnp.logical_and(ih, qc == kr)          # bool AND, no f32 temporaries

    # Row-normalize; rows with zero sum become all-zero (matches nan_to_num).
    ihf = ih.astype(f32)
    rs = jnp.sum(ihf, axis=1, keepdims=True)        # (tq, 1)
    inv = jnp.where(rs > 0.0, pl.reciprocal(rs, approx=True), 0.0)
    norm = ihf * inv

    xk = xk_ref[0]                                  # (seq, d) in input dtype
    xq = xq_ref[0]                                  # (tq, d)

    # Mixing + projections: operands in x.dtype (bf16-ready), f32 accumulation.
    h0 = jnp.dot(norm.astype(xk.dtype), xk, preferred_element_type=f32)   # (tq, d)
    y = (jnp.dot(h0.astype(xk.dtype), w0t_ref[...], preferred_element_type=f32)
         + jnp.dot(xq, w1t_ref[...], preferred_element_type=f32)
         + b_ref[...])                              # fused (b0 + b1)
    o_ref[0] = y.astype(o_ref.dtype)


def ngram_forward(input_ids, x, w0, b0, w1, b1, *, ngram=1, shift_step=1,
                  q_block=None):
    """Pallas implementation of Ngram.forward(x, input_ids=input_ids)."""
    bsz, seq, d = x.shape
    ids = input_ids.astype(jnp.int32)

    # Pre-shifted token ids (wrapper-side "roll"): wrapped entries are killed in the
    # kernel by the col >= shift_step + ngram - 1 boundary mask.
    #   qids[b, m, g] = ids[b, m - g]            (query side, diagonal ngram shift)
    #   kids[b, g, n] = ids[b, n - shift - g]    (key side, includes shift_step)
    qids = jnp.stack([jnp.roll(ids, g, axis=-1) for g in range(ngram)], axis=-1)
    kids = jnp.stack([jnp.roll(ids, shift_step + g, axis=-1)
                      for g in range(ngram)], axis=1)

    w0t = jnp.transpose(w0)                         # (d_in, d_out): y = h @ W^T + b
    w1t = jnp.transpose(w1)
    bcat = (b0 + b1).reshape(1, d)                  # fused bias

    # Query-tile size: keep full seq when small; otherwise a lane/sublane friendly
    # divisor so VMEM stays O(q_block * seq) and the axis can be megacore-parallel.
    if q_block is None:
        q_block = seq
        if seq > 512:
            for cand in (512, 256, 128):
                if seq % cand == 0:
                    q_block = cand
                    break
    assert seq % q_block == 0, "q_block must divide seq"
    n_q = seq // q_block

    kernel = functools.partial(_ngram_kernel, ngram=ngram, shift_step=shift_step)

    return pl.pallas_call(
        kernel,
        out_shape=jax.ShapeDtypeStruct((bsz, seq, d), x.dtype),
        grid=(bsz, n_q),
        in_specs=[
            pl.BlockSpec((1, q_block, ngram), lambda b, q: (b, q, 0)),  # qids tile
            pl.BlockSpec((1, ngram, seq), lambda b, q: (b, 0, 0)),      # kids (full keys)
            pl.BlockSpec((1, seq, d), lambda b, q: (b, 0, 0)),          # x, full key rows
            pl.BlockSpec((1, q_block, d), lambda b, q: (b, q, 0)),      # x, query rows
            pl.BlockSpec((d, d), lambda b, q: (0, 0)),                  # W0^T
            pl.BlockSpec((d, d), lambda b, q: (0, 0)),                  # W1^T
            pl.BlockSpec((1, d), lambda b, q: (0, 0)),                  # b0 + b1
        ],
        out_specs=pl.BlockSpec((1, q_block, d), lambda b, q: (b, q, 0)),
        compiler_params=pltpu.CompilerParams(
            dimension_semantics=("parallel", "parallel"),
            vmem_limit_bytes=48 * 1024 * 1024),
    )(qids, kids, x, x, w0t, w1t, bcat)


def ngram_reference(input_ids, x, w0, b0, w1, b1, *, ngram=1, shift_step=1):
    """Pure-JAX reference mirroring the PyTorch code (for verification)."""
    bsz, seq, d = x.shape
    ids = input_ids
    mask0 = ids[:, None, :] == ids[:, :, None]
    causal = jnp.tril(jnp.ones((seq, seq), dtype=bool), k=-1)
    mask0 = jnp.logical_and(mask0, causal)
    masks = [mask0.astype(jnp.int32)]
    cur = mask0
    for _ in range(1, ngram):
        cur = jnp.pad(cur, ((0, 0), (1, 0), (1, 0)))[:, :seq, :seq]
        masks.append(cur.astype(jnp.int32))
    ih = jnp.stack(masks, axis=-1).sum(axis=-1) >= ngram
    if shift_step > 0:
        ih = jnp.pad(ih, ((0, 0), (0, 0), (shift_step, 0)))[:, :, :seq]
    ih = jnp.logical_and(ih, causal)
    ihf = ih.astype(jnp.float32)
    rs = ihf.sum(axis=2, keepdims=True)
    norm = jnp.where(rs > 0, ihf / jnp.where(rs > 0, rs, 1.0), 0.0)
    h0 = jnp.einsum('bmn,bnz->bmz', norm, x)
    return h0 @ w0.T + b0 + x @ w1.T + b1


if __name__ == "__main__":
    bsz, seq, d_model = 2, 16, 32

    key = jax.random.PRNGKey(0)
    k_ids, k_x, kw0, kb0, kw1, kb1 = jax.random.split(key, 6)

    # small vocab so the induction-head mask has repeated tokens
    input_ids = jax.random.randint(k_ids, (bsz, seq), 0, 4, dtype=jnp.int32)
    x = jax.random.normal(k_x, (bsz, seq, d_model), dtype=jnp.float32)

    # nn.Linear(d_model, d_model) default init: U(-1/sqrt(d), 1/sqrt(d))
    bound = 1.0 / (d_model ** 0.5)
    w0 = jax.random.uniform(kw0, (d_model, d_model), jnp.float32, -bound, bound)
    b0 = jax.random.uniform(kb0, (d_model,), jnp.float32, -bound, bound)
    w1 = jax.random.uniform(kw1, (d_model, d_model), jnp.float32, -bound, bound)
    b1 = jax.random.uniform(kb1, (d_model,), jnp.float32, -bound, bound)

    ok = True
    for ngram in (1, 2):            # module default ngram=1; also exercise ngram>1
        for q_block in (None, 8):   # single-tile and multi-query-tile paths
            y = ngram_forward(input_ids, x, w0, b0, w1, b1,
                              ngram=ngram, q_block=q_block)
            y = jax.block_until_ready(y)
            y_ref = ngram_reference(input_ids, x, w0, b0, w1, b1, ngram=ngram)
            # approx reciprocal in the kernel -> slightly looser tolerance than f32
            if not jnp.allclose(y, y_ref, rtol=2e-3, atol=2e-3):
                ok = False

    print("KERNEL_OK" if ok else "KERNEL_MISMATCH")
</pallas_src>

<mosaic_0001>
module attributes {stable_mosaic.version = 11 : i64} {
  func.func @_ngram_kernel(%arg0: i32, %arg1: i32, %arg2: memref<1x16x1xi32, #tpu.memory_space<vmem>>, %arg3: memref<1x1x16xi32, #tpu.memory_space<vmem>>, %arg4: memref<1x16x32xf32, #tpu.memory_space<vmem>>, %arg5: memref<1x16x32xf32, #tpu.memory_space<vmem>>, %arg6: memref<32x32xf32, #tpu.memory_space<vmem>>, %arg7: memref<32x32xf32, #tpu.memory_space<vmem>>, %arg8: memref<1x32xf32, #tpu.memory_space<vmem>>, %arg9: memref<1x16x32xf32, #tpu.memory_space<vmem>>) attributes {dimension_semantics = [#tpu.dimension_semantics<parallel>, #tpu.dimension_semantics<parallel>], iteration_bounds = array<i64: 2, 1>, scalar_prefetch = 0 : i64, scratch_operands = 0 : i64, tpu.core_type = #tpu.core_type<tc>, window_params = [{transform_indices = @transform_0, window_bounds = array<i64: 1, 16, 1>}, {transform_indices = @transform_1, window_bounds = array<i64: 1, 1, 16>}, {transform_indices = @transform_2, window_bounds = array<i64: 1, 16, 32>}, {transform_indices = @transform_3, window_bounds = array<i64: 1, 16, 32>}, {pipeline_mode = #tpu.pipeline_mode<synchronous>, transform_indices = @transform_4, window_bounds = array<i64: 32, 32>}, {pipeline_mode = #tpu.pipeline_mode<synchronous>, transform_indices = @transform_5, window_bounds = array<i64: 32, 32>}, {pipeline_mode = #tpu.pipeline_mode<synchronous>, transform_indices = @transform_6, window_bounds = array<i64: 1, 32>}, {transform_indices = @transform_7, window_bounds = array<i64: 1, 16, 32>}]} {
    %c16_i32 = arith.constant 16 : i32
    %0 = arith.muli %arg1, %c16_i32 : i32
    %1 = tpu.iota {dimensions = array<i32: 0>} : vector<16x16xi32>
    %2 = vector.broadcast %0 : i32 to vector<16x16xi32>
    %3 = arith.addi %1, %2 : vector<16x16xi32>
    %4 = tpu.iota {dimensions = array<i32: 1>} : vector<16x16xi32>
    %5 = arith.cmpi slt, %4, %3 : vector<16x16xi32>
    %c1_i32 = arith.constant 1 : i32
    %6 = vector.broadcast %c1_i32 : i32 to vector<16x16xi32>
    %7 = arith.cmpi sge, %4, %6 : vector<16x16xi32>
    %8 = arith.andi %5, %7 : vector<16x16xi1>
    %c0 = arith.constant 0 : index
    %c0_0 = arith.constant 0 : index
    %c0_1 = arith.constant 0 : index
    %9 = vector.load %arg2[%c0, %c0_0, %c0_1] : memref<1x16x1xi32, #tpu.memory_space<vmem>>, vector<1x16x1xi32>
    %10 = vector.shape_cast %9 : vector<1x16x1xi32> to vector<16x1xi32>
    %c0_2 = arith.constant 0 : index
    %c0_3 = arith.constant 0 : index
    %c0_4 = arith.constant 0 : index
    %11 = vector.load %arg3[%c0_2, %c0_3, %c0_4] : memref<1x1x16xi32, #tpu.memory_space<vmem>>, vector<1x1x16xi32>
    %12 = vector.shape_cast %11 : vector<1x1x16xi32> to vector<1x16xi32>
    %13 = vector.broadcast %10 : vector<16x1xi32> to vector<16x16xi32>
    %14 = vector.broadcast %12 : vector<1x16xi32> to vector<16x16xi32>
    %15 = arith.cmpi eq, %13, %14 : vector<16x16xi32>
    %16 = arith.andi %8, %15 : vector<16x16xi1>
    %17 = arith.extui %16 : vector<16x16xi1> to vector<16x16xi32>
    %18 = arith.sitofp %17 : vector<16x16xi32> to vector<16x16xf32>
    %cst = arith.constant dense<0.000000e+00> : vector<16xf32>
    %19 = vector.multi_reduction <add>, %18, %cst [1] : vector<16x16xf32> to vector<16xf32>
    %20 = vector.shape_cast %19 : vector<16xf32> to vector<16x1xf32>
    %cst_5 = arith.constant 0.000000e+00 : f32
    %21 = vector.broadcast %cst_5 : f32 to vector<16x1xf32>
    %22 = arith.cmpf ogt, %20, %21 : vector<16x1xf32>
    %23 = tpu.reciprocal %20 {approx = true} : vector<16x1xf32> -> vector<16x1xf32>
    %cst_6 = arith.constant 0.000000e+00 : f32
    %24 = vector.broadcast %cst_6 : f32 to vector<16x1xf32>
    %25 = arith.select %22, %23, %24 : vector<16x1xi1>, vector<16x1xf32>
    %26 = vector.broadcast %25 : vector<16x1xf32> to vector<16x16xf32>
    %27 = arith.mulf %18, %26 : vector<16x16xf32>
    %c0_7 = arith.constant 0 : index
    %c0_8 = arith.constant 0 : index
    %c0_9 = arith.constant 0 : index
    %28 = vector.load %arg4[%c0_7, %c0_8, %c0_9] : memref<1x16x32xf32, #tpu.memory_space<vmem>>, vector<1x16x32xf32>
    %29 = vector.shape_cast %28 : vector<1x16x32xf32> to vector<16x32xf32>
    %c0_10 = arith.constant 0 : index
    %c0_11 = arith.constant 0 : index
    %c0_12 = arith.constant 0 : index
    %30 = vector.load %arg5[%c0_10, %c0_11, %c0_12] : memref<1x16x32xf32, #tpu.memory_space<vmem>>, vector<1x16x32xf32>
    %31 = vector.shape_cast %30 : vector<1x16x32xf32> to vector<16x32xf32>
    %cst_13 = arith.constant dense<0.000000e+00> : vector<16x32xf32>
    %32 = tpu.matmul %27, %29, %cst_13 {dimension_numbers = #tpu.dot_dimension_numbers<[1], [0], [0], [1], [0, 0, 1, 1], [], []>} : vector<16x16xf32>, vector<16x32xf32>, vector<16x32xf32> -> vector<16x32xf32>
    %c0_14 = arith.constant 0 : index
    %c0_15 = arith.constant 0 : index
    %33 = vector.load %arg6[%c0_14, %c0_15] : memref<32x32xf32, #tpu.memory_space<vmem>>, vector<32x32xf32>
    %cst_16 = arith.constant dense<0.000000e+00> : vector<16x32xf32>
    %34 = tpu.matmul %32, %33, %cst_16 {dimension_numbers = #tpu.dot_dimension_numbers<[1], [0], [0], [1], [0, 0, 1, 1], [], []>} : vector<16x32xf32>, vector<32x32xf32>, vector<16x32xf32> -> vector<16x32xf32>
    %c0_17 = arith.constant 0 : index
    %c0_18 = arith.constant 0 : index
    %35 = vector.load %arg7[%c0_17, %c0_18] : memref<32x32xf32, #tpu.memory_space<vmem>>, vector<32x32xf32>
    %cst_19 = arith.constant dense<0.000000e+00> : vector<16x32xf32>
    %36 = tpu.matmul %31, %35, %cst_19 {dimension_numbers = #tpu.dot_dimension_numbers<[1], [0], [0], [1], [0, 0, 1, 1], [], []>} : vector<16x32xf32>, vector<32x32xf32>, vector<16x32xf32> -> vector<16x32xf32>
    %37 = arith.addf %34, %36 : vector<16x32xf32>
    %c0_20 = arith.constant 0 : index
    %c0_21 = arith.constant 0 : index
    %38 = vector.load %arg8[%c0_20, %c0_21] : memref<1x32xf32, #tpu.memory_space<vmem>>, vector<1x32xf32>
    %39 = vector.broadcast %38 : vector<1x32xf32> to vector<16x32xf32>
    %40 = arith.addf %37, %39 : vector<16x32xf32>
    %c0_22 = arith.constant 0 : index
    %c0_23 = arith.constant 0 : index
    %c0_24 = arith.constant 0 : index
    %41 = vector.load %arg9[%c0_22, %c0_23, %c0_24] : memref<1x16x32xf32, #tpu.memory_space<vmem>>, vector<1x16x32xf32>
    %42 = vector.shape_cast %41 : vector<1x16x32xf32> to vector<16x32xf32>
    %43 = vector.shape_cast %40 : vector<16x32xf32> to vector<1x16x32xf32>
    tpu.vector_store %arg9[%c0_22, %c0_23, %c0_24], %43 {strides = array<i32>} : memref<1x16x32xf32, #tpu.memory_space<vmem>>, vector<1x16x32xf32>,
    return
  }
  func.func @transform_0(%arg0: i32, %arg1: i32) -> (i32, i32, i32) {
    %c0_i32 = arith.constant 0 : i32
    %c0_i32_0 = arith.constant 0 : i32
    return %arg0, %arg1, %c0_i32 : i32, i32, i32
  }
  func.func @transform_1(%arg0: i32, %arg1: i32) -> (i32, i32, i32) {
    %c0_i32 = arith.constant 0 : i32
    %c0_i32_0 = arith.constant 0 : i32
    %c0_i32_1 = arith.constant 0 : i32
    return %arg0, %c0_i32, %c0_i32_0 : i32, i32, i32
  }
  func.func @transform_2(%arg0: i32, %arg1: i32) -> (i32, i32, i32) {
    %c0_i32 = arith.constant 0 : i32
    %c0_i32_0 = arith.constant 0 : i32
    %c0_i32_1 = arith.constant 0 : i32
    return %arg0, %c0_i32, %c0_i32_0 : i32, i32, i32
  }
  func.func @transform_3(%arg0: i32, %arg1: i32) -> (i32, i32, i32) {
    %c0_i32 = arith.constant 0 : i32
    %c0_i32_0 = arith.constant 0 : i32
    return %arg0, %arg1, %c0_i32 : i32, i32, i32
  }
  func.func @transform_4(%arg0: i32, %arg1: i32) -> (i32, i32) {
    %c0_i32 = arith.constant 0 : i32
    %c0_i32_0 = arith.constant 0 : i32
    %c0_i32_1 = arith.constant 0 : i32
    return %c0_i32, %c0_i32_0 : i32, i32
  }
  func.func @transform_5(%arg0: i32, %arg1: i32) -> (i32, i32) {
    %c0_i32 = arith.constant 0 : i32
    %c0_i32_0 = arith.constant 0 : i32
    %c0_i32_1 = arith.constant 0 : i32
    return %c0_i32, %c0_i32_0 : i32, i32
  }
  func.func @transform_6(%arg0: i32, %arg1: i32) -> (i32, i32) {
    %c0_i32 = arith.constant 0 : i32
    %c0_i32_0 = arith.constant 0 : i32
    %c0_i32_1 = arith.constant 0 : i32
    return %c0_i32, %c0_i32_0 : i32, i32
  }
  func.func @transform_7(%arg0: i32, %arg1: i32) -> (i32, i32, i32) {
    %c0_i32 = arith.constant 0 : i32
    %c0_i32_0 = arith.constant 0 : i32
    return %arg0, %arg1, %c0_i32 : i32, i32, i32
  }
}

</mosaic_0001>

<llo_original>
// kernel: tpu_custom_call.1
$region0: #{tpu_custom_call.1}
  #allocation0 [shape = 'u32[]', space=smem, size = 0x4, offset = 0x4, fixed_abs, tag = 'smem constant byte address 0x4 - core index']
  #allocation1 [shape = 'u32[144,128]{1,0:T(1,128)}', space=vmem, size = 0x12000, scoped, tag = 'internal scratch']
  %s0 = inlined_call_operand.vmem [shape: s32[2,16,1], index: 0, kind: input, shape index: {}]
  %s1 = inlined_call_operand.vmem [shape: s32[2,1,16], index: 1, kind: input, shape index: {}]
  %s2 = inlined_call_operand.vmem [shape: f32[2,16,32], index: 2, kind: input, shape index: {}]
  %s3 = inlined_call_operand.hbm [shape: f32[2,16,32], index: 3, kind: input, shape index: {}]
  %s4 = inlined_call_operand.hbm [shape: f32[32,32], index: 4, kind: input, shape index: {}]
  %s5 = inlined_call_operand.hbm [shape: f32[32,32], index: 5, kind: input, shape index: {}]
  %s6 = inlined_call_operand.vmem [shape: f32[1,32], index: 6, kind: input, shape index: {}]
  %s7 = inlined_call_operand.hbm [shape: f32[2,16,32], index: 7, kind: output, shape index: {}]
  %s8 = sld [smem:[#allocation0]]
  $region73: #{tpu_custom_call.1} parent=0
    _
  %s10 = ssub.s32 1, %s8
  %s11 = scalar_select 0, %s10, %s8
  $region1: #{tpu_custom_call.1} parent=0
    #allocation2 [shape = 'u8[16384]{0}', space=vmem, size = 0x4000, scoped, tag = 'input window, operand 3']
    #allocation3 [shape = 's32[2]{0}', space=sflag, size = 0x8, scoped, tag = 'scoped memory for tpu_custom_call.1']
    #allocation4 [shape = 's32[2]{0}', space=sflag, size = 0x8, scoped, tag = 'scoped memory for tpu_custom_call.1']
    #allocation5 [shape = 'u8[16384]{0}', space=vmem, size = 0x4000, scoped, tag = 'input window, operand 4, single buffered']
    #allocation6 [shape = 's32[1]{0}', space=sflag, size = 0x4, scoped, tag = 'scoped memory for tpu_custom_call.1']
    #allocation7 [shape = 'u8[16384]{0}', space=vmem, size = 0x4000, scoped, tag = 'input window, operand 5, single buffered']
    #allocation8 [shape = 'u8[16384]{0}', space=vmem, size = 0x4000, scoped, tag = 'output window, operand 0']
    %12 = vsyncpa [#allocation3], 0
    %s13 = scalar_lea.sflag [#allocation3], 1
    %14 = vsyncpa %s13, 0
    %15 = vsyncpa [#allocation6], 0
    %16 = vsyncpa [#allocation4], 0
    %s17 = scalar_lea.sflag [#allocation4], 1
    %18 = vsyncpa %s17, 0
    loop: start=0, step=1, limit=4
    $region2: #{tpu_custom_call.1} parent=1 // loop_pre_header
      _
    $region3: #{tpu_custom_call.1} parent=1 // loop_header
      %s20 = sphi 0, %s24
      %p21 = scmp.ge.s32.totalorder %s20, 4
      %s27 = sphi 0, %s39
      %s28 = sphi 0, %s35
      %s29 = sphi 0, %s27
      %s30 = sphi 0, %s28
      %s31 = sphi 0, %s29
      %s32 = sphi 0, %s30
      %s44 = sphi 0, %s46
      %s47 = sphi 0, %s44
      %s48 = sphi 0, %s47
      %s64 = sphi 0, %s48
      %s70 = sphi 0, %s72
      %s73 = sphi 0, %s70
      %s74 = sphi 0, %s73
      %s90 = sphi 0, %s74
      %s96 = sphi 0, %s98
      %s99 = sphi 0, %s96
      %s100 = sphi 0, %s99
      %s116 = sphi 0, %s100
      %s124 = sphi 0, %s126
      %s127 = sphi 0, %s124
      %s128 = sphi 0, %s127
      %s144 = sphi 0, %s128
      %s148 = sphi 0, %s148
      %s150 = sphi 0, %s148
      %s151 = sphi 0, %s150
      %s165 = sphi 0, %s151
      %s169 = sphi 0, %s169
      %s171 = sphi 0, %s169
      %s172 = sphi 0, %s171
      %s186 = sphi 0, %s172
      %s190 = sphi 0, %s190
      %s192 = sphi 0, %s190
      %s193 = sphi 0, %s192
      %s207 = sphi 0, %s193
      %s215 = sphi 0, %s217
      %s218 = sphi 0, %s215
      %s219 = sphi 0, %s218
      %s235 = sphi 0, %s219
    $region4: #{tpu_custom_call.1} parent=1 // loop_header_branch
      %23 = sbr.rel (%p21) target = $region8
    $region5: #{tpu_custom_call.1} parent=1 // loop_body
      %s25 = ssub.s32 %s20, 1
      %s26 = ssub.s32 %s20, 2
      %s33 = sadd.s32 1, %s28
      %p34 = scmp.ge.s32.totalorder %s33, 1
      %s35 = scalar_select %p34, 0, %s33
      %s36 = sadd.s32 1, %s27
      %s37 = scalar_select %p34, %s36, %s27
      %p38 = scmp.ge.s32.totalorder %s37, 2
      %s39 = scalar_select %p38, 0, %s37
      %s40 = ssub.s32 %s27, %s39
      %s41 = ssub.s32 %s28, %s35
      %s42 = sor.u32 %s40, %s41
      %p43 = scmp.eq.s32.totalorder %s42, 0
      %s45 = sadd.s32 %s44, 1
      %s46 = scalar_select %p43, %s44, %s45
      %p49 = pneg %p43
      %p50 = scmp.eq.s32.totalorder %s20, 1
      %p51 = por %p49, %p50
      %p52 = scmp.ne.s32.totalorder %s44, %s47
      %p53 = scmp.eq.s32.totalorder %s20, 0
      %p54 = por %p52, %p53
      %p55 = scmp.ne.s32.totalorder %s44, %s47
      %p56 = scmp.eq.s32.totalorder %s25, 1
      %p57 = por %p55, %p56
      %p58 = scmp.ne.s32.totalorder %s47, %s48
      %p59 = scmp.eq.s32.totalorder %s25, 0
      %p60 = por %p58, %p59
      %p61 = scmp.ne.s32.totalorder %s47, %s48
      %p62 = scmp.eq.s32.totalorder %s26, 1
      %p63 = por %p61, %p62
      %p65 = scmp.ne.s32.totalorder %s48, %s64
      %p66 = scmp.eq.s32.totalorder %s26, 0
      %p67 = por %p65, %p66
      %s68 = ssub.s32 %s27, %s39
      %p69 = scmp.eq.s32.totalorder %s68, 0
      %s71 = sadd.s32 %s70, 1
      %s72 = scalar_select %p69, %s70, %s71
      %p75 = pneg %p69
      %p76 = scmp.eq.s32.totalorder %s20, 1
      %p77 = por %p75, %p76
      %p78 = scmp.ne.s32.totalorder %s70, %s73
      %p79 = scmp.eq.s32.totalorder %s20, 0
      %p80 = por %p78, %p79
      %p81 = scmp.ne.s32.totalorder %s70, %s73
      %p82 = scmp.eq.s32.totalorder %s25, 1
      %p83 = por %p81, %p82
      %p84 = scmp.ne.s32.totalorder %s73, %s74
      %p85 = scmp.eq.s32.totalorder %s25, 0
      %p86 = por %p84, %p85
      %p87 = scmp.ne.s32.totalorder %s73, %s74
      %p88 = scmp.eq.s32.totalorder %s26, 1
      %p89 = por %p87, %p88
      %p91 = scmp.ne.s32.totalorder %s74, %s90
      %p92 = scmp.eq.s32.totalorder %s26, 0
      %p93 = por %p91, %p92
      %s94 = ssub.s32 %s27, %s39
      %p95 = scmp.eq.s32.totalorder %s94, 0
      %s97 = sadd.s32 %s96, 1
      %s98 = scalar_select %p95, %s96, %s97
      %p101 = pneg %p95
      %p102 = scmp.eq.s32.totalorder %s20, 1
      %p103 = por %p101, %p102
      %p104 = scmp.ne.s32.totalorder %s96, %s99
      %p105 = scmp.eq.s32.totalorder %s20, 0
      %p106 = por %p104, %p105
      %p107 = scmp.ne.s32.totalorder %s96, %s99
      %p108 = scmp.eq.s32.totalorder %s25, 1
      %p109 = por %p107, %p108
      %p110 = scmp.ne.s32.totalorder %s99, %s100
      %p111 = scmp.eq.s32.totalorder %s25, 0
      %p112 = por %p110, %p111
      %p113 = scmp.ne.s32.totalorder %s99, %s100
      %p114 = scmp.eq.s32.totalorder %s26, 1
      %p115 = por %p113, %p114
      %p117 = scmp.ne.s32.totalorder %s100, %s116
      %p118 = scmp.eq.s32.totalorder %s26, 0
      %p119 = por %p117, %p118
      %s120 = ssub.s32 %s27, %s39
      %s121 = ssub.s32 %s28, %s35
      %s122 = sor.u32 %s120, %s121
      %p123 = scmp.eq.s32.totalorder %s122, 0
      %s125 = sadd.s32 %s124, 1
      %s126 = scalar_select %p123, %s124, %s125
      %p129 = pneg %p123
      %p130 = scmp.eq.s32.totalorder %s20, 1
      %p131 = por %p129, %p130
      %p132 = scmp.ne.s32.totalorder %s124, %s127
      %p133 = scmp.eq.s32.totalorder %s20, 0
      %p134 = por %p132, %p133
      %p135 = scmp.ne.s32.totalorder %s124, %s127
      %p136 = scmp.eq.s32.totalorder %s25, 1
      %p137 = por %p135, %p136
      %p138 = scmp.ne.s32.totalorder %s127, %s128
      %p139 = scmp.eq.s32.totalorder %s25, 0
      %p140 = por %p138, %p139
      %p141 = scmp.ne.s32.totalorder %s127, %s128
      %p142 = scmp.eq.s32.totalorder %s26, 1
      %p143 = por %p141, %p142
      %p145 = scmp.ne.s32.totalorder %s128, %s144
      %p146 = scmp.eq.s32.totalorder %s26, 0
      %p147 = por %p145, %p146
      %s149 = sadd.s32 %s148, 1
      %p152 = scmp.eq.s32.totalorder %s20, 1
      %p153 = scmp.ne.s32.totalorder %s148, %s150
      %p154 = scmp.eq.s32.totalorder %s20, 0
      %p155 = por %p153, %p154
      %p156 = scmp.ne.s32.totalorder %s148, %s150
      %p157 = scmp.eq.s32.totalorder %s25, 1
      %p158 = por %p156, %p157
      %p159 = scmp.ne.s32.totalorder %s150, %s151
      %p160 = scmp.eq.s32.totalorder %s25, 0
      %p161 = por %p159, %p160
      %p162 = scmp.ne.s32.totalorder %s150, %s151
      %p163 = scmp.eq.s32.totalorder %s26, 1
      %p164 = por %p162, %p163
      %p166 = scmp.ne.s32.totalorder %s151, %s165
      %p167 = scmp.eq.s32.totalorder %s26, 0
      %p168 = por %p166, %p167
      %s170 = sadd.s32 %s169, 1
      %p173 = scmp.eq.s32.totalorder %s20, 1
      %p174 = scmp.ne.s32.totalorder %s169, %s171
      %p175 = scmp.eq.s32.totalorder %s20, 0
      %p176 = por %p174, %p175
      %p177 = scmp.ne.s32.totalorder %s169, %s171
      %p178 = scmp.eq.s32.totalorder %s25, 1
      %p179 = por %p177, %p178
      %p180 = scmp.ne.s32.totalorder %s171, %s172
      %p181 = scmp.eq.s32.totalorder %s25, 0
      %p182 = por %p180, %p181
      %p183 = scmp.ne.s32.totalorder %s171, %s172
      %p184 = scmp.eq.s32.totalorder %s26, 1
      %p185 = por %p183, %p184
      %p187 = scmp.ne.s32.totalorder %s172, %s186
      %p188 = scmp.eq.s32.totalorder %s26, 0
      %p189 = por %p187, %p188
      %s191 = sadd.s32 %s190, 1
      %p194 = scmp.eq.s32.totalorder %s20, 1
      %p195 = scmp.ne.s32.totalorder %s190, %s192
      %p196 = scmp.eq.s32.totalorder %s20, 0
      %p197 = por %p195, %p196
      %p198 = scmp.ne.s32.totalorder %s190, %s192
      %p199 = scmp.eq.s32.totalorder %s25, 1
      %p200 = por %p198, %p199
      %p201 = scmp.ne.s32.totalorder %s192, %s193
      %p202 = scmp.eq.s32.totalorder %s25, 0
      %p203 = por %p201, %p202
      %p204 = scmp.ne.s32.totalorder %s192, %s193
      %p205 = scmp.eq.s32.totalorder %s26, 1
      %p206 = por %p204, %p205
      %p208 = scmp.ne.s32.totalorder %s193, %s207
      %p209 = scmp.eq.s32.totalorder %s26, 0
      %p210 = por %p208, %p209
      %s211 = ssub.s32 %s27, %s39
      %s212 = ssub.s32 %s28, %s35
      %s213 = sor.u32 %s211, %s212
      %p214 = scmp.eq.s32.totalorder %s213, 0
      %s216 = sadd.s32 %s215, 1
      %s217 = scalar_select %p214, %s215, %s216
      %p220 = pneg %p214
      %p221 = scmp.eq.s32.totalorder %s20, 1
      %p222 = por %p220, %p221
      %p223 = scmp.ne.s32.totalorder %s215, %s218
      %p224 = scmp.eq.s32.totalorder %s20, 0
      %p225 = por %p223, %p224
      %p226 = scmp.ne.s32.totalorder %s215, %s218
      %p227 = scmp.eq.s32.totalorder %s25, 1
      %p228 = por %p226, %p227
      %p229 = scmp.ne.s32.totalorder %s218, %s219
      %p230 = scmp.eq.s32.totalorder %s25, 0
      %p231 = por %p229, %p230
      %p232 = scmp.ne.s32.totalorder %s218, %s219
      %p233 = scmp.eq.s32.totalorder %s26, 1
      %p234 = por %p232, %p233
      %p236 = scmp.ne.s32.totalorder %s219, %s235
      %p237 = scmp.eq.s32.totalorder %s26, 0
      %p238 = por %p236, %p237
      %p239 = scmp.le.s32.totalorder 1, %s20
      %p240 = scmp.lt.s32.totalorder %s20, 3
      %p241 = pnand %p239, %p240
      %p242 = pneg %p241
      // Predicated region
      $region9: #{tpu_custom_call.1} parent=5 // pred_check
        _
      $region10: #{tpu_custom_call.1} parent=5 // pred_check_branch
        %244 = sbr.rel (%p241) target = $region12
      $region11: #{tpu_custom_call.1} parent=5 // pred_region
        %s245 = ssub.s32 %s20, 1
        // Predicated region
        $region13: #{tpu_custom_call.1} parent=11 // pred_check
          %p246 = pneg %p161
        $region14: #{tpu_custom_call.1} parent=11 // pred_check_branch
          %248 = sbr.rel (%p246) target = $region16
        $region15: #{tpu_custom_call.1} parent=11 // pred_region
          %s250 = ssub.s32 512, 512
          %251 = vsyncadd [#allocation6], %s250
          %s252 = sshll.u32 [#allocation5], 4
          %s253 = int_to_ptr.vmem [resolvable:$true] %s252
          %258 = dma.hbm_to_vmem [thread:$0]  %s4, 512, %s253, [#allocation6], 128, 128, 8
        $region16: #{tpu_custom_call.1} parent=11 // pred_fallthru
          _
        // Predicated region
        $region17: #{tpu_custom_call.1} parent=11 // pred_check
          %p259 = pneg %p182
        $region18: #{tpu_custom_call.1} parent=11 // pred_check_branch
          %261 = sbr.rel (%p259) target = $region20
        $region19: #{tpu_custom_call.1} parent=11 // pred_region
          %s263 = ssub.s32 512, 512
          %264 = vsyncadd [#allocation6], %s263
          %s265 = sshll.u32 [#allocation7], 4
          %s266 = int_to_ptr.vmem [resolvable:$true] %s265
          %271 = dma.hbm_to_vmem [thread:$0]  %s5, 512, %s266, [#allocation6], 128, 128, 8
        $region20: #{tpu_custom_call.1} parent=11 // pred_fallthru
          _
        // Predicated region
        $region21: #{tpu_custom_call.1} parent=11 // pred_check
          %p272 = pneg %p203
        $region22: #{tpu_custom_call.1} parent=11 // pred_check_branch
          %274 = sbr.rel (%p272) target = $region24
        $region23: #{tpu_custom_call.1} parent=11 // pred_region
          _
        $region24: #{tpu_custom_call.1} parent=11 // pred_fallthru
          _
      $region12: #{tpu_custom_call.1} parent=5 // pred_fallthru
        _
      %p275 = scmp.lt.s32.totalorder %s20, 2
      // Predicated region
      $region25: #{tpu_custom_call.1} parent=5 // pred_check
        %p276 = pneg %p275
      $region26: #{tpu_custom_call.1} parent=5 // pred_check_branch
        %278 = sbr.rel (%p276) target = $region28
      $region27: #{tpu_custom_call.1} parent=5 // pred_region
        // Predicated region
        $region29: #{tpu_custom_call.1} parent=27 // pred_check
          %p279 = pneg %p54
        $region30: #{tpu_custom_call.1} parent=27 // pred_check_branch
          %281 = sbr.rel (%p279) target = $region32
        $region31: #{tpu_custom_call.1} parent=27 // pred_region
          %s282 = smul.u32 2, %s28
          %p283 = scmp.lt.s32.totalorder %s27, 1
          %s284 = scalar_select %p283, %s27, 1
          %p285 = scmp.lt.s32.totalorder %s282, 1
          %s286 = scalar_select %p285, %s282, 1
          %s287 = smul.addr %s284, 2
          %s288 = sadd.s32 %s286, %s287
          %s289 = smul.addr %s288, 8
          %s290 = scalar_lea.vmem %s0, %s289
          %s291 = smul.u32 2, %s28
        $region32: #{tpu_custom_call.1} parent=27 // pred_fallthru
          _
        // Predicated region
        $region33: #{tpu_custom_call.1} parent=27 // pred_check
          %p292 = pneg %p80
        $region34: #{tpu_custom_call.1} parent=27 // pred_check_branch
          %294 = sbr.rel (%p292) target = $region36
        $region35: #{tpu_custom_call.1} parent=27 // pred_region
          %p295 = scmp.lt.s32.totalorder %s27, 1
          %s296 = scalar_select %p295, %s27, 1
          %s297 = scalar_lea.vmem %s1, %s296
        $region36: #{tpu_custom_call.1} parent=27 // pred_fallthru
          _
        // Predicated region
        $region37: #{tpu_custom_call.1} parent=27 // pred_check
          %p298 = pneg %p106
        $region38: #{tpu_custom_call.1} parent=27 // pred_check_branch
          %300 = sbr.rel (%p298) target = $region40
        $region39: #{tpu_custom_call.1} parent=27 // pred_region
          %p301 = scmp.lt.s32.totalorder %s27, 1
          %s302 = scalar_select %p301, %s27, 1
          %s303 = smul.addr %s302, 2
          %s304 = smul.addr %s303, 8
          %s305 = scalar_lea.vmem %s2, %s304
        $region40: #{tpu_custom_call.1} parent=27 // pred_fallthru
          _
        // Predicated region
        $region41: #{tpu_custom_call.1} parent=27 // pred_check
          %p306 = pneg %p134
        $region42: #{tpu_custom_call.1} parent=27 // pred_check_branch
          %308 = sbr.rel (%p306) target = $region44
        $region43: #{tpu_custom_call.1} parent=27 // pred_region
          %s309 = sand.u32 %s124, 1
          %s310 = scalar_lea.sflag [#allocation3], %s309
          %s311 = sand.u32 %s124, 1
          %s312 = smul.addr %s311, 16
          %s313 = scalar_lea.vmem [#allocation2], %s312
          %s314 = smul.u32 2, %s28
          %s316 = ssub.s32 256, 256
          %317 = vsyncadd %s310, %s316
          %s318 = smul.addr %s27, 2
          %s319 = sadd.s32 %s314, %s318
          %s320 = smul.addr %s319, 128
          %s321 = scalar_lea.hbm %s3, %s320
          %s322 = sshll.u32 %s313, 4
          %s323 = int_to_ptr.vmem [resolvable:$true] %s322
          %328 = dma.hbm_to_vmem [thread:$0]  %s321, 256, %s323, %s310, 128, 128, 8
        $region44: #{tpu_custom_call.1} parent=27 // pred_fallthru
          _
      $region28: #{tpu_custom_call.1} parent=5 // pred_fallthru
        _
      %p329 = scmp.le.s32.totalorder 1, %s20
      %p330 = scmp.lt.s32.totalorder %s20, 3
      %p331 = pnand %p329, %p330
      %p332 = pneg %p331
      // Predicated region
      $region45: #{tpu_custom_call.1} parent=5 // pred_check
        _
      $region46: #{tpu_custom_call.1} parent=5 // pred_check_branch
        %334 = sbr.rel (%p331) target = $region48
      $region47: #{tpu_custom_call.1} parent=5 // pred_region
        %s335 = ssub.s32 %s20, 1
        %s336 = sand.u32 %s127, 1
        %s337 = scalar_lea.sflag [#allocation3], %s336
        %s338 = sand.u32 %s127, 1
        %s339 = smul.addr %s338, 16
        %s340 = scalar_lea.vmem [#allocation2], %s339
        // Predicated region
        $region49: #{tpu_custom_call.1} parent=47 // pred_check
          %p341 = pneg %p140
        $region50: #{tpu_custom_call.1} parent=47 // pred_check_branch
          %343 = sbr.rel (%p341) target = $region52
        $region51: #{tpu_custom_call.1} parent=47 // pred_region
          %344 = dma.done %s337, 256
        $region52: #{tpu_custom_call.1} parent=47 // pred_fallthru
          _
        // Predicated region
        $region53: #{tpu_custom_call.1} parent=47 // pred_check
          %p345 = pneg %p161
        $region54: #{tpu_custom_call.1} parent=47 // pred_check_branch
          %347 = sbr.rel (%p345) target = $region56
        $region55: #{tpu_custom_call.1} parent=47 // pred_region
          %348 = dma.done [#allocation6], 512
        $region56: #{tpu_custom_call.1} parent=47 // pred_fallthru
          _
        // Predicated region
        $region57: #{tpu_custom_call.1} parent=47 // pred_check
          %p349 = pneg %p182
        $region58: #{tpu_custom_call.1} parent=47 // pred_check_branch
          %351 = sbr.rel (%p349) target = $region60
        $region59: #{tpu_custom_call.1} parent=47 // pred_region
          %352 = dma.done [#allocation6], 512
        $region60: #{tpu_custom_call.1} parent=47 // pred_fallthru
          _
        %s353 = smul.u32 2, %s30
        %p354 = scmp.lt.s32.totalorder %s29, 1
        %s355 = scalar_select %p354, %s29, 1
        %p356 = scmp.lt.s32.totalorder %s353, 1
        %s357 = scalar_select %p356, %s353, 1
        %s358 = smul.addr %s355, 2
        %s359 = sadd.s32 %s357, %s358
        %s360 = smul.addr %s359, 8
        %s361 = scalar_lea.vmem %s0, %s360
        %p362 = pneg %p60
        %p363 = pneg %p57
        %p364 = scmp.lt.s32.totalorder %s29, 1
        %s365 = scalar_select %p364, %s29, 1
        %s366 = scalar_lea.vmem %s1, %s365
        %p367 = pneg %p86
        %p368 = pneg %p83
        %p369 = scmp.lt.s32.totalorder %s29, 1
        %s370 = scalar_select %p369, %s29, 1
        %s371 = smul.addr %s370, 2
        %s372 = smul.addr %s371, 8
        %s373 = scalar_lea.vmem %s2, %s372
        %p374 = pneg %p112
        %p375 = pneg %p109
        %s376 = sand.u32 %s127, 1
        %s377 = scalar_lea.sflag [#allocation3], %s376
        %s378 = sand.u32 %s127, 1
        %s379 = smul.addr %s378, 16
        %s380 = scalar_lea.vmem [#allocation2], %s379
        %p381 = pneg %p140
        %p382 = pneg %p137
        %p383 = pneg %p161
        %p384 = pneg %p158
        %p385 = pneg %p182
        %p386 = pneg %p179
        %p387 = pneg %p203
        %p388 = pneg %p200
        %p389 = pneg %p231
        %p390 = pneg %p228
        %s391 = sand.u32 %s218, 1
        %s392 = scalar_lea.sflag [#allocation4], %s391
        %s393 = sand.u32 %s218, 1
        %s394 = smul.addr %s393, 16
        %s395 = scalar_lea.vmem [#allocation8], %s394
        %s396 = smul.u32 2, %s30
        %p397 = scmp.lt.s32.totalorder %s29, 1
        %s398 = scalar_select %p397, %s29, 1
        %p399 = scmp.lt.s32.totalorder %s396, 1
        %s400 = scalar_select %p399, %s396, 1
        %s401 = smul.addr %s398, 2
        %s402 = sadd.s32 %s400, %s401
        %s403 = smul.addr %s402, 8
        %s404 = scalar_lea.vmem %s0, %s403
        %s405 = smul.u32 2, %s30
        %p406 = scmp.lt.s32.totalorder %s29, 1
        %s407 = scalar_select %p406, %s29, 1
        %s408 = scalar_lea.vmem %s1, %s407
        %p409 = scmp.lt.s32.totalorder %s29, 1
        %s410 = scalar_select %p409, %s29, 1
        %s411 = smul.addr %s410, 2
        %s412 = smul.addr %s411, 8
        %s413 = scalar_lea.vmem %s2, %s412
        %s414 = smul.u32 2, %s30
        %s415 = smul.u32 2, %s30
        %s416 = smul.u32 %s30, 16
        %v417 = vlaneseq
        %v418 = vshrl.u32 %v417, 7
        %v419 = vadd.s32 %v418, 8
        %v420 = vstv %s416
        %v421 = vadd.s32 %v418, %v420
        %v422 = vadd.s32 %v419, %v420
        %v423 = vlaneseq
        %v424 = vand.u32 %v423, 127
        %vm425 = vcmp.lt.s32.totalorder %v424, %v421
        %vm426 = vcmp.lt.s32.totalorder %v424, %v422
        %vm427 = vcmp.ge.s32.totalorder %v424, 1
        %vm428 = vmand %vm425, %vm427
        %vm429 = vmand %vm426, %vm427
        %v430 = vld [vmem:[%s404] sm:$0xff]
        %v431 = vld [vmem:[%s404 + $0x8] sm:$0xff]
        %v432 = vld [vmem:[%s408] sm:$0x1]
        %433 = vset.pattern.permute.xlu0 0
        %434 = vperm.xlu0 %433, %v430
        %v435 = vpop.permute.xlu0 %434
        %436 = vset.pattern.permute.xlu0 0
        %437 = vperm.xlu0 %436, %v431
        %v438 = vpop.permute.xlu0 %437
        %v439 = vlaneseq
        %v440 = vshrl.u32 %v439, 7
        %v441 = vsub.s32 0, %v440
        %v442 = vrot.slane %v432, %v441
        %vm443 = vcmp.eq.s32.totalorder %v435, %v442
        %vm444 = vcmp.eq.s32.totalorder %v438, %v442
        %vm445 = vmand %vm428, %vm443
        %vm446 = vmand %vm429, %vm444
        %v447 = vsel %vm445, 1, 0
        %v448 = vsel %vm446, 1, 0
        %v449 = vcvt.s32.f32 %v447
        %v450 = vcvt.s32.f32 %v448
        %vm451 = vcmask 130048
        %v452 = vsel %vm451, %v449, 0.0
        %453 = vadd.xlane.f32.xlu0 %v452
        %v454 = vpop.xlane.xlu0 %453
        %v455 = vsel %vm451, %v450, 0.0
        %456 = vadd.xlane.f32.xlu0 %v455
        %v457 = vpop.xlane.xlu0 %456
        %vm458 = vcmp.gt.f32.partialorder %v454, 0.0
        %vm459 = vcmp.gt.f32.partialorder %v457, 0.0
        %v460 = vrcp.pop %v454
        %v461 = vrcp.pop %v457
        %v462 = vsel %vm458, %v460, 0.0
        %v463 = vsel %vm459, %v461, 0.0
        %v464 = vmul.f32 %v449, %v462
        %v465 = vmul.f32 %v450, %v463
        %v466 = vld [vmem:[%s413] sm:$0xff]
        %v467 = vld [vmem:[%s413 + $0x8] sm:$0xff]
        %v468 = vld [vmem:[%s340] sm:$0xff]
        %v469 = vld [vmem:[%s340 + $0x8] sm:$0xff]
        %v471 = vsel %vm451, %v464, 0
        %v474 = vsel %vm451, %v465, 0
        %476 = vmatprep.subr.mxu0 0.0
        %477 = vmatpush1.msra.mxu0 %v466
        %478 = vmatprep.subr.mxu0 0.0
        %479 = vmatpush1.msra.mxu0 %v467
        %480 = vmatprep.subr.mxu0 0.0
        %481 = vmatpush1.msra.mxu0 0.0
        %482 = vmatprep.subr.mxu0 0.0
        %483 = vmatpush1.msra.mxu0 0.0
        %484 = vmatprep.subr.mxu0 0.0
        %485 = vmatpush1.msra.mxu0 0.0
        %486 = vmatprep.subr.mxu0 0.0
        %487 = vmatpush1.msra.mxu0 0.0
        %488 = vmatprep.subr.mxu0 0.0
        %489 = vmatpush1.msra.mxu0 0.0
        %490 = vmatprep.subr.mxu0 0.0
        %491 = vmatpush1.msra.mxu0 0.0
        %492 = vmatprep.subr.mxu0 0.0
        %493 = vmatpush1.msra.mxu0 0.0
        %494 = vmatprep.subr.mxu0 0.0
        %495 = vmatpush1.msra.mxu0 0.0
        %496 = vmatprep.subr.mxu0 0.0
        %497 = vmatpush1.msra.mxu0 0.0
        %498 = vmatprep.subr.mxu0 0.0
        %499 = vmatpush1.msra.mxu0 0.0
        %500 = vmatprep.subr.mxu0 0.0
        %501 = vmatpush1.msra.mxu0 0.0
        %502 = vmatprep.subr.mxu0 0.0
        %503 = vmatpush1.msra.mxu0 0.0
        %504 = vmatprep.subr.mxu0 0.0
        %505 = vmatpush1.msra.mxu0 0.0
        %506 = vmatprep.subr.mxu0 0.0
        %507 = vmatpush1.msra.mxu0 0.0
        %508 = vmatprep.subr.mxu0 0.0
        %509 = vmatpush1.msra.mxu0 0.0
        %510 = vmatprep.subr.mxu0 0.0
        %511 = vmatpush1.msra.mxu0 0.0
        %512 = vmatprep.subr.mxu0 0.0
        %513 = vmatpush1.msra.mxu0 0.0
        %514 = vmatprep.subr.mxu0 0.0
        %515 = vmatpush1.msra.mxu0 0.0
        %516 = vmatprep.subr.mxu0 0.0
        %517 = vmatpush1.msra.mxu0 0.0
        %518 = vmatprep.subr.mxu0 0.0
        %519 = vmatpush1.msra.mxu0 0.0
        %520 = vmatprep.subr.mxu0 0.0
        %521 = vmatpush1.msra.mxu0 0.0
        %522 = vmatprep.subr.mxu0 0.0
        %523 = vmatpush1.msra.mxu0 0.0
        %524 = vmatprep.subr.mxu0 0.0
        %525 = vmatpush1.msra.mxu0 0.0
        %526 = vmatprep.subr.mxu0 0.0
        %527 = vmatpush1.msra.mxu0 0.0
        %528 = vmatprep.subr.mxu0 0.0
        %529 = vmatpush1.msra.mxu0 0.0
        %530 = vmatprep.subr.mxu0 0.0
        %531 = vmatpush1.msra.mxu0 0.0
        %532 = vmatprep.subr.mxu0 0.0
        %533 = vmatpush1.msra.mxu0 0.0
        %534 = vmatprep.subr.mxu0 0.0
        %535 = vmatpush1.msra.mxu0 0.0
        %536 = vmatprep.subr.mxu0 0.0
        %537 = vmatpush1.msra.mxu0 0.0
        %538 = vmatprep.subr.mxu0 0.0
        %539 = vmatpush1.msra.mxu0 0.0
        %540 = vmatprep.mubr.f32.mxu0 0.0
        %541 = vmatmul.mubr.f32.gmra.mrb[0].mxu0 %v471
        %v542 = vpop.f32.mrb[0].mxu0
        %v543 = vadd.f32 0.0, %v542
        %v544 = vpop.f32.mrb[0].mxu0
        %545 = vmatprep.mubr.f32.mxu0 0.0
        %546 = vmatmul.mubr.f32.gmra.mrb[0].mxu0 %v474
        %v547 = vpop.f32.mrb[0].mxu0
        %v548 = vadd.f32 0.0, %v547
        %v549 = vpop.f32.mrb[0].mxu0
        %550 = vdwg.mxu0
        %v551 = vld [vmem:[#allocation5] sm:$0xff]
        %v552 = vld [vmem:[#allocation5 + $0x8] sm:$0xff]
        %v553 = vld [vmem:[#allocation5 + $0x10] sm:$0xff]
        %v554 = vld [vmem:[#allocation5 + $0x18] sm:$0xff]
        %v555 = vld [vmem:[#allocation7] sm:$0xff]
        %v556 = vld [vmem:[#allocation7 + $0x8] sm:$0xff]
        %v557 = vld [vmem:[#allocation7 + $0x10] sm:$0xff]
        %v558 = vld [vmem:[#allocation7 + $0x18] sm:$0xff]
        %vm559 = vcmask 261120
        %v561 = vsel %vm559, %v468, 0
        %v564 = vsel %vm559, %v469, 0
        %566 = vmatprep.subr.mxu0 0.0
        %567 = vmatpush1.msra.mxu0 %v555
        %568 = vmatprep.subr.mxu0 0.0
        %569 = vmatpush1.msra.mxu0 %v556
        %570 = vmatprep.subr.mxu0 0.0
        %571 = vmatpush1.msra.mxu0 %v557
        %572 = vmatprep.subr.mxu0 0.0
        %573 = vmatpush1.msra.mxu0 %v558
        %574 = vmatprep.subr.mxu0 0.0
        %575 = vmatpush1.msra.mxu0 0.0
        %576 = vmatprep.subr.mxu0 0.0
        %577 = vmatpush1.msra.mxu0 0.0
        %578 = vmatprep.subr.mxu0 0.0
        %579 = vmatpush1.msra.mxu0 0.0
        %580 = vmatprep.subr.mxu0 0.0
        %581 = vmatpush1.msra.mxu0 0.0
        %582 = vmatprep.subr.mxu0 0.0
        %583 = vmatpush1.msra.mxu0 0.0
        %584 = vmatprep.subr.mxu0 0.0
        %585 = vmatpush1.msra.mxu0 0.0
        %586 = vmatprep.subr.mxu0 0.0
        %587 = vmatpush1.msra.mxu0 0.0
        %588 = vmatprep.subr.mxu0 0.0
        %589 = vmatpush1.msra.mxu0 0.0
        %590 = vmatprep.subr.mxu0 0.0
        %591 = vmatpush1.msra.mxu0 0.0
        %592 = vmatprep.subr.mxu0 0.0
        %593 = vmatpush1.msra.mxu0 0.0
        %594 = vmatprep.subr.mxu0 0.0
        %595 = vmatpush1.msra.mxu0 0.0
        %596 = vmatprep.subr.mxu0 0.0
        %597 = vmatpush1.msra.mxu0 0.0
        %598 = vmatprep.subr.mxu0 0.0
        %599 = vmatpush1.msra.mxu0 0.0
        %600 = vmatprep.subr.mxu0 0.0
        %601 = vmatpush1.msra.mxu0 0.0
        %602 = vmatprep.subr.mxu0 0.0
        %603 = vmatpush1.msra.mxu0 0.0
        %604 = vmatprep.subr.mxu0 0.0
        %605 = vmatpush1.msra.mxu0 0.0
        %606 = vmatprep.subr.mxu0 0.0
        %607 = vmatpush1.msra.mxu0 0.0
        %608 = vmatprep.subr.mxu0 0.0
        %609 = vmatpush1.msra.mxu0 0.0
        %610 = vmatprep.subr.mxu0 0.0
        %611 = vmatpush1.msra.mxu0 0.0
        %612 = vmatprep.subr.mxu0 0.0
        %613 = vmatpush1.msra.mxu0 0.0
        %614 = vmatprep.subr.mxu0 0.0
        %615 = vmatpush1.msra.mxu0 0.0
        %616 = vmatprep.subr.mxu0 0.0
        %617 = vmatpush1.msra.mxu0 0.0
        %618 = vmatprep.subr.mxu0 0.0
        %619 = vmatpush1.msra.mxu0 0.0
        %620 = vmatprep.subr.mxu0 0.0
        %621 = vmatpush1.msra.mxu0 0.0
        %622 = vmatprep.subr.mxu0 0.0
        %623 = vmatpush1.msra.mxu0 0.0
        %624 = vmatprep.subr.mxu0 0.0
        %625 = vmatpush1.msra.mxu0 0.0
        %626 = vmatprep.subr.mxu0 0.0
        %627 = vmatpush1.msra.mxu0 0.0
        %628 = vmatprep.subr.mxu0 0.0
        %629 = vmatpush1.msra.mxu0 0.0
        %630 = vmatprep.mubr.f32.mxu0 0.0
        %631 = vmatmul.mubr.f32.gmra.mrb[0].mxu0 %v561
        %v632 = vpop.f32.mrb[0].mxu0
        %v633 = vadd.f32 0.0, %v632
        %v634 = vpop.f32.mrb[0].mxu0
        %635 = vmatprep.mubr.f32.mxu0 0.0
        %636 = vmatmul.mubr.f32.gmra.mrb[0].mxu0 %v564
        %v637 = vpop.f32.mrb[0].mxu0
        %v638 = vadd.f32 0.0, %v637
        %v639 = vpop.f32.mrb[0].mxu0
        %640 = vdwg.mxu0
        %v642 = vsel %vm559, %v543, 0
        %v645 = vsel %vm559, %v548, 0
        %647 = vmatprep.subr.mxu0 0.0
        %648 = vmatpush1.msra.mxu0 %v551
        %649 = vmatprep.subr.mxu0 0.0
        %650 = vmatpush1.msra.mxu0 %v552
        %651 = vmatprep.subr.mxu0 0.0
        %652 = vmatpush1.msra.mxu0 %v553
        %653 = vmatprep.subr.mxu0 0.0
        %654 = vmatpush1.msra.mxu0 %v554
        %655 = vmatprep.subr.mxu0 0.0
        %656 = vmatpush1.msra.mxu0 0.0
        %657 = vmatprep.subr.mxu0 0.0
        %658 = vmatpush1.msra.mxu0 0.0
        %659 = vmatprep.subr.mxu0 0.0
        %660 = vmatpush1.msra.mxu0 0.0
        %661 = vmatprep.subr.mxu0 0.0
        %662 = vmatpush1.msra.mxu0 0.0
        %663 = vmatprep.subr.mxu0 0.0
        %664 = vmatpush1.msra.mxu0 0.0
        %665 = vmatprep.subr.mxu0 0.0
        %666 = vmatpush1.msra.mxu0 0.0
        %667 = vmatprep.subr.mxu0 0.0
        %668 = vmatpush1.msra.mxu0 0.0
        %669 = vmatprep.subr.mxu0 0.0
        %670 = vmatpush1.msra.mxu0 0.0
        %671 = vmatprep.subr.mxu0 0.0
        %672 = vmatpush1.msra.mxu0 0.0
        %673 = vmatprep.subr.mxu0 0.0
        %674 = vmatpush1.msra.mxu0 0.0
        %675 = vmatprep.subr.mxu0 0.0
        %676 = vmatpush1.msra.mxu0 0.0
        %677 = vmatprep.subr.mxu0 0.0
        %678 = vmatpush1.msra.mxu0 0.0
        %679 = vmatprep.subr.mxu0 0.0
        %680 = vmatpush1.msra.mxu0 0.0
        %681 = vmatprep.subr.mxu0 0.0
        %682 = vmatpush1.msra.mxu0 0.0
        %683 = vmatprep.subr.mxu0 0.0
        %684 = vmatpush1.msra.mxu0 0.0
        %685 = vmatprep.subr.mxu0 0.0
        %686 = vmatpush1.msra.mxu0 0.0
        %687 = vmatprep.subr.mxu0 0.0
        %688 = vmatpush1.msra.mxu0 0.0
        %689 = vmatprep.subr.mxu0 0.0
        %690 = vmatpush1.msra.mxu0 0.0
        %691 = vmatprep.subr.mxu0 0.0
        %692 = vmatpush1.msra.mxu0 0.0
        %693 = vmatprep.subr.mxu0 0.0
        %694 = vmatpush1.msra.mxu0 0.0
        %695 = vmatprep.subr.mxu0 0.0
        %696 = vmatpush1.msra.mxu0 0.0
        %697 = vmatprep.subr.mxu0 0.0
        %698 = vmatpush1.msra.mxu0 0.0
        %699 = vmatprep.subr.mxu0 0.0
        %700 = vmatpush1.msra.mxu0 0.0
        %701 = vmatprep.subr.mxu0 0.0
        %702 = vmatpush1.msra.mxu0 0.0
        %703 = vmatprep.subr.mxu0 0.0
        %704 = vmatpush1.msra.mxu0 0.0
        %705 = vmatprep.subr.mxu0 0.0
        %706 = vmatpush1.msra.mxu0 0.0
        %707 = vmatprep.subr.mxu0 0.0
        %708 = vmatpush1.msra.mxu0 0.0
        %709 = vmatprep.subr.mxu0 0.0
        %710 = vmatpush1.msra.mxu0 0.0
        %711 = vmatprep.mubr.f32.mxu0 0.0
        %712 = vmatmul.mubr.f32.gmra.mrb[0].mxu0 %v642
        %v713 = vpop.f32.mrb[0].mxu0
        %v714 = vadd.f32 %v633, %v713
        %v715 = vpop.f32.mrb[0].mxu0
        %716 = vmatprep.mubr.f32.mxu0 0.0
        %717 = vmatmul.mubr.f32.gmra.mrb[0].mxu0 %v645
        %v718 = vpop.f32.mrb[0].mxu0
        %v719 = vadd.f32 %v638, %v718
        %v720 = vpop.f32.mrb[0].mxu0
        %721 = vdwg.mxu0
        %v722 = vld [vmem:[%s6] sm:$0x1]
        %v724 = vlaneseq
        %v725 = vshrl.u32 %v724, 7
        %v726 = vsub.s32 0, %v725
        %v727 = vrot.slane %v722, %v726
        %v729 = vadd.f32 %v714, %v727
        %v730 = vadd.f32 %v719, %v727
        %731 = vst.msk [vmem:[%s395] sm:$0xff] %vm559, %v729
        %732 = vst.msk [vmem:[%s395 + $0x8] sm:$0xff] %vm559, %v730
        %s733 = sand.u32 %s218, 1
        %s734 = scalar_lea.sflag [#allocation4], %s733
        %s735 = sand.u32 %s218, 1
        %s736 = smul.addr %s735, 16
        %s737 = scalar_lea.vmem [#allocation8], %s736
        // Predicated region
        $region61: #{tpu_custom_call.1} parent=47 // pred_check
          %p738 = pneg %p228
        $region62: #{tpu_custom_call.1} parent=47 // pred_check_branch
          %740 = sbr.rel (%p738) target = $region64
        $region63: #{tpu_custom_call.1} parent=47 // pred_region
          %s741 = smul.u32 2, %s30
          %s743 = ssub.s32 256, 256
          %744 = vsyncadd %s734, %s743
          %s745 = smul.addr %s29, 2
          %s746 = sadd.s32 %s741, %s745
          %s747 = smul.addr %s746, 128
          %s748 = scalar_lea.hbm %s7, %s747
          %s749 = sshll.u32 %s737, 4
          %s750 = int_to_ptr.vmem [resolvable:$true] %s749
          %755 = dma.vmem_to_hbm [thread:$0]  %s750, 256, %s748, %s734, 128, 128, 8
        $region64: #{tpu_custom_call.1} parent=47 // pred_fallthru
          _
      $region48: #{tpu_custom_call.1} parent=5 // pred_fallthru
        _
      %p756 = scmp.le.s32.totalorder 2, %s20
      // Predicated region
      $region65: #{tpu_custom_call.1} parent=5 // pred_check
        %p757 = pneg %p756
      $region66: #{tpu_custom_call.1} parent=5 // pred_check_branch
        %759 = sbr.rel (%p757) target = $region68
      $region67: #{tpu_custom_call.1} parent=5 // pred_region
        %s760 = ssub.s32 %s20, 2
        // Predicated region
        $region69: #{tpu_custom_call.1} parent=67 // pred_check
          %p761 = pneg %p234
        $region70: #{tpu_custom_call.1} parent=67 // pred_check_branch
          %763 = sbr.rel (%p761) target = $region72
        $region71: #{tpu_custom_call.1} parent=67 // pred_region
          %s764 = sand.u32 %s219, 1
          %s765 = scalar_lea.sflag [#allocation4], %s764
          %s766 = sand.u32 %s219, 1
          %s767 = smul.addr %s766, 16
          %s768 = scalar_lea.vmem [#allocation8], %s767
          %769 = dma.done %s765, 256
        $region72: #{tpu_custom_call.1} parent=67 // pred_fallthru
          _
      $region68: #{tpu_custom_call.1} parent=5 // pred_fallthru
        _
    $region6: #{tpu_custom_call.1} parent=1 // loop_footer
      %s24 = sadd.s32 1, %s20
    $region7: #{tpu_custom_call.1} parent=1 // loop_footer_branch
      %19 = sbr.rel target = $region3
    $region8: #{tpu_custom_call.1} parent=1 // loop_exit
      _
    %770 = vsyncpa [#allocation3], 1
    %s771 = scalar_lea.sflag [#allocation3], 1
    %772 = vsyncpa %s771, 1
    %773 = vsyncpa [#allocation6], 1
    %774 = vsyncpa [#allocation4], 1
    %s775 = scalar_lea.sflag [#allocation4], 1
    %776 = vsyncpa %s775, 1

</llo_original>
